<compile_context>
chip_gen: v7x
topology: tpu7x:2x2x1
jax: 0.10.0
libtpu: 0.0.40
codegen_flags: <defaults>
</compile_context>

<pallas_src>
import numpy as np
import jax
import jax.numpy as jnp
from jax.experimental import pallas as pl
from jax.experimental.pallas import tpu as pltpu

# ----- SubPolicy configuration (mirrors __init__, deterministic) -------------
P1, OP1, MAG_IDX1 = 0.8, "brightness", 5
P2, OP2, MAG_IDX2 = 0.6, "contrast", 3

_RANGES = {
    "brightness": np.linspace(0.0, 0.9, 10),
    "contrast": np.linspace(0.0, 0.9, 10),
}
MAG1 = float(_RANGES[OP1][MAG_IDX1])   # 0.5
MAG2 = float(_RANGES[OP2][MAG_IDX2])   # 0.3
FACTOR1 = 1.0 + MAG1                   # brightness enhancement factor
FACTOR2 = 1.0 + MAG2                   # contrast enhancement factor


def _subpolicy_kernel(flags_ref, x_ref, o_ref):
    """flags_ref: SMEM int32[2] (apply op1 / apply op2).
    x_ref / o_ref: (1, Bt, P) tile, P = C*H*W (lane-dense), values in [0, 255]."""
    img = x_ref[...].astype(jnp.float32)

    f1 = jnp.where(flags_ref[0] > 0, jnp.float32(FACTOR1), jnp.float32(1.0))
    f2 = jnp.where(flags_ref[1] > 0, jnp.float32(FACTOR2), jnp.float32(1.0))

    # --- op1: brightness = blend(black, img, f1) == img * f1 (PIL clamps/op) --
    y = jnp.clip(img * f1, 0.0, 255.0)

    # --- op2: contrast = blend(per-image mean, img, f2) -----------------------
    # TODO(synk): PIL's ImageEnhance.Contrast blends against the rounded
    # grayscale (L) mean; with C=4 there is no canonical L conversion, so the
    # all-channel per-image mean is used here.
    m = jnp.mean(y, axis=-1, keepdims=True)          # (1, Bt, 1) per-image mean
    z = jnp.clip(m + (y - m) * f2, 0.0, 255.0)

    if jnp.issubdtype(o_ref.dtype, jnp.floating):
        o_ref[...] = z.astype(o_ref.dtype)
    else:
        # round-half-up and quantize (values are already in [0, 255])
        o_ref[...] = (z + 0.5).astype(jnp.int32).astype(o_ref.dtype)


def _choose_images_per_block(n, per_image_bytes, target_bytes=1 << 20):
    """Pick images-per-block: big enough to amortize ~0.35us/step overhead,
    small enough to double-buffer comfortably, and keep >=2 grid steps when
    possible so both v7x TensorCores get work (v5e/v6e are single-TC)."""
    max_bt = max(1, target_bytes // max(1, per_image_bytes))
    divisors = [d for d in range(1, n + 1) if n % d == 0 and d <= max_bt] or [1]
    pref = [d for d in divisors if n // d >= 2]
    return max(pref) if pref else max(divisors)


def sub_policy(x, apply_flags):
    # Layout: NCHW (as PyTorch). Each image is flattened to a single lane-dense
    # row of P = C*H*W elements; Bt images form one VMEM block per grid step.
    N, C, H, W = x.shape
    P = C * H * W
    assert P % 128 == 0, "C*H*W must be a multiple of 128 for a lane-dense layout"

    bt = _choose_images_per_block(N, P * x.dtype.itemsize)
    G = N // bt
    x2 = x.reshape(G, bt, P)

    out = pl.pallas_call(
        _subpolicy_kernel,
        out_shape=jax.ShapeDtypeStruct((G, bt, P), x.dtype),
        grid_spec=pltpu.PrefetchScalarGridSpec(
            num_scalar_prefetch=1,                     # apply_flags -> SMEM
            grid=(G,),
            in_specs=[pl.BlockSpec((1, bt, P), lambda g, flags: (g, 0, 0))],
            out_specs=pl.BlockSpec((1, bt, P), lambda g, flags: (g, 0, 0)),
        ),
        compiler_params=pltpu.CompilerParams(
            dimension_semantics=("parallel",),
            vmem_limit_bytes=32 * 1024 * 1024,         # safe on v5e/v6e/v7x
        ),
    )(apply_flags, x2)
    return out.reshape(N, C, H, W)


if __name__ == "__main__":
    key = jax.random.PRNGKey(0)
    k_img, k_p = jax.random.split(key)

    # uint8 NCHW image batch in [0, 255] — uint8 I/O cuts HBM traffic 4x vs f32.
    x = jax.random.randint(k_img, (2, 4, 16, 16), 0, 256, dtype=jnp.int32)
    x = x.astype(jnp.uint8)

    # Forward-time stochastic gating (random.random() < p), made deterministic.
    # The module draws one pair of coins per forward call, shared by the input.
    u = jax.random.uniform(k_p, (2,))
    apply_flags = jnp.array([u[0] < P1, u[1] < P2], dtype=jnp.int32)

    y = sub_policy(x, apply_flags)
    jax.block_until_ready(y)
    assert y.shape == x.shape and y.dtype == x.dtype
    print("KERNEL_OK")
</pallas_src>

<mosaic_0001>
module attributes {stable_mosaic.version = 11 : i64} {
  func.func @_subpolicy_kernel(%arg0: i32, %arg1: memref<2xi32, #tpu.memory_space<smem>>, %arg2: memref<1x1x1024xi8, #tpu.memory_space<vmem>>, %arg3: memref<1x1x1024xi8, #tpu.memory_space<vmem>>) attributes {dimension_semantics = [#tpu.dimension_semantics<parallel>], iteration_bounds = array<i64: 2>, scalar_prefetch = 1 : i64, scratch_operands = 0 : i64, tpu.core_type = #tpu.core_type<tc>, window_params = [{transform_indices = @transform_0, window_bounds = array<i64: 1, 1, 1024>}, {transform_indices = @transform_1, window_bounds = array<i64: 1, 1, 1024>}]} {
    %c0 = arith.constant 0 : index
    %c0_0 = arith.constant 0 : index
    %c0_1 = arith.constant 0 : index
    %0 = vector.load %arg2[%c0, %c0_0, %c0_1] : memref<1x1x1024xi8, #tpu.memory_space<vmem>>, vector<1x1x1024xi8>
    %1 = arith.uitofp %0 : vector<1x1x1024xi8> to vector<1x1x1024xf32>
    %c0_2 = arith.constant 0 : index
    %2 = memref.load %arg1[%c0_2] : memref<2xi32, #tpu.memory_space<smem>>
    %c0_i32 = arith.constant 0 : i32
    %3 = arith.cmpi sgt, %2, %c0_i32 : i32
    %cst = arith.constant 1.500000e+00 : f32
    %cst_3 = arith.constant 1.000000e+00 : f32
    %4 = arith.select %3, %cst, %cst_3 : f32
    %c1 = arith.constant 1 : index
    %5 = memref.load %arg1[%c1] : memref<2xi32, #tpu.memory_space<smem>>
    %c0_i32_4 = arith.constant 0 : i32
    %6 = arith.cmpi sgt, %5, %c0_i32_4 : i32
    %cst_5 = arith.constant 1.300000e+00 : f32
    %cst_6 = arith.constant 1.000000e+00 : f32
    %7 = arith.select %6, %cst_5, %cst_6 : f32
    %8 = vector.broadcast %4 : f32 to vector<1x1x1024xf32>
    %9 = arith.mulf %1, %8 : vector<1x1x1024xf32>
    %cst_7 = arith.constant 0.000000e+00 : f32
    %cst_8 = arith.constant 2.550000e+02 : f32
    %10 = vector.broadcast %cst_7 : f32 to vector<1x1x1024xf32>
    %11 = arith.maximumf %10, %9 : vector<1x1x1024xf32>
    %12 = vector.broadcast %cst_8 : f32 to vector<1x1x1024xf32>
    %13 = arith.minimumf %12, %11 : vector<1x1x1024xf32>
    %cst_9 = arith.constant dense<0.000000e+00> : vector<1x1xf32>
    %14 = vector.multi_reduction <add>, %13, %cst_9 [2] : vector<1x1x1024xf32> to vector<1x1xf32>
    %15 = vector.shape_cast %14 : vector<1x1xf32> to vector<1x1x1xf32>
    %cst_10 = arith.constant 1.024000e+03 : f32
    %16 = vector.broadcast %cst_10 : f32 to vector<1x1x1xf32>
    %17 = arith.divf %15, %16 : vector<1x1x1xf32>
    %18 = vector.broadcast %17 : vector<1x1x1xf32> to vector<1x1x1024xf32>
    %19 = arith.subf %13, %18 : vector<1x1x1024xf32>
    %20 = vector.broadcast %7 : f32 to vector<1x1x1024xf32>
    %21 = arith.mulf %19, %20 : vector<1x1x1024xf32>
    %22 = vector.broadcast %17 : vector<1x1x1xf32> to vector<1x1x1024xf32>
    %23 = arith.addf %22, %21 : vector<1x1x1024xf32>
    %cst_11 = arith.constant 0.000000e+00 : f32
    %cst_12 = arith.constant 2.550000e+02 : f32
    %24 = vector.broadcast %cst_11 : f32 to vector<1x1x1024xf32>
    %25 = arith.maximumf %24, %23 : vector<1x1x1024xf32>
    %26 = vector.broadcast %cst_12 : f32 to vector<1x1x1024xf32>
    %27 = arith.minimumf %26, %25 : vector<1x1x1024xf32>
    %cst_13 = arith.constant 5.000000e-01 : f32
    %28 = vector.broadcast %cst_13 : f32 to vector<1x1x1024xf32>
    %29 = arith.addf %27, %28 : vector<1x1x1024xf32>
    %30 = arith.fptosi %29 : vector<1x1x1024xf32> to vector<1x1x1024xi32>
    %31 = arith.trunci %30 : vector<1x1x1024xi32> to vector<1x1x1024xi8>
    %c0_14 = arith.constant 0 : index
    %c0_15 = arith.constant 0 : index
    %c0_16 = arith.constant 0 : index
    %32 = vector.load %arg3[%c0_14, %c0_15, %c0_16] : memref<1x1x1024xi8, #tpu.memory_space<vmem>>, vector<1x1x1024xi8>
    tpu.vector_store %arg3[%c0_14, %c0_15, %c0_16], %31 {strides = array<i32>} : memref<1x1x1024xi8, #tpu.memory_space<vmem>>, vector<1x1x1024xi8>,
    return
  }
  func.func @transform_0(%arg0: i32, %arg1: memref<2xi32, #tpu.memory_space<smem>>) -> (i32, i32, i32) {
    %c0_i32 = arith.constant 0 : i32
    %c0_i32_0 = arith.constant 0 : i32
    %c0_i32_1 = arith.constant 0 : i32
    return %arg0, %c0_i32, %c0_i32_0 : i32, i32, i32
  }
  func.func @transform_1(%arg0: i32, %arg1: memref<2xi32, #tpu.memory_space<smem>>) -> (i32, i32, i32) {
    %c0_i32 = arith.constant 0 : i32
    %c0_i32_0 = arith.constant 0 : i32
    %c0_i32_1 = arith.constant 0 : i32
    return %arg0, %c0_i32, %c0_i32_0 : i32, i32, i32
  }
}

</mosaic_0001>

<llo_original>
// kernel: tpu_custom_call.1
$region0: #{tpu_custom_call.1}
  #allocation0 [shape = 'u32[]', space=smem, size = 0x4, offset = 0x4, fixed_abs, tag = 'smem constant byte address 0x4 - core index']
  #allocation1 [shape = 'u32[144,128]{1,0:T(1,128)}', space=vmem, size = 0x12000, scoped, tag = 'internal scratch']
  #allocation2 [shape = 's32[1]{0}', space=sflag, size = 0x4, scoped, tag = 'scoped memory for tpu_custom_call.1']
  #allocation3 [shape = 'u8[512]{0}', space=smem, size = 0x200, scoped, tag = 'prefetched SMEM operand 0']
  %s0 = inlined_call_operand.vmem [shape: s32[2], index: 0, kind: input, shape index: {}]
  %s1 = inlined_call_operand.vmem [shape: u8[2,1,1024], index: 1, kind: input, shape index: {}]
  %s2 = inlined_call_operand.vmem [shape: u8[2,1,1024], index: 2, kind: output, shape index: {}]
  %s3 = sld [smem:[#allocation0]]
  $region37: #{tpu_custom_call.1} parent=0
    _
  %s5 = ssub.s32 1, %s3
  %s6 = scalar_select 0, %s5, %s3
  %s7 = sshll.u32 %s0, 4
  %s8 = int_to_ptr.vmem [resolvable:$true] %s7
  %10 = dma.vmem_to_smem %s8, 16, [#allocation3], [#allocation2]
  %11 = dma.done [#allocation2], 16
  %12 = sfence
  loop: start=0, step=1, limit=4
  $region2: #{tpu_custom_call.1} parent=0 // loop_pre_header
    _
  $region3: #{tpu_custom_call.1} parent=0 // loop_header
    %s14 = sphi 0, %s18
    %p15 = scmp.ge.s32.totalorder %s14, 4
    %s24 = sphi 0, %s26
    %s27 = sphi 0, %s24
    %s28 = sphi 0, %s27
    %s44 = sphi 0, %s28
    %s50 = sphi 0, %s52
    %s53 = sphi 0, %s50
    %s54 = sphi 0, %s53
    %s70 = sphi 0, %s54
  $region4: #{tpu_custom_call.1} parent=0 // loop_header_branch
    %17 = sbr.rel (%p15) target = $region8
  $region5: #{tpu_custom_call.1} parent=0 // loop_body
    %s19 = ssub.s32 %s14, 1
    %s20 = ssub.s32 %s14, 2
    %s21 = sadd.s32 %s14, 1
    %s22 = ssub.s32 %s14, %s21
    %p23 = scmp.eq.s32.totalorder %s22, 0
    %s25 = sadd.s32 %s24, 1
    %s26 = scalar_select %p23, %s24, %s25
    %p29 = pneg %p23
    %p30 = scmp.eq.s32.totalorder %s14, 1
    %p31 = por %p29, %p30
    %p32 = scmp.ne.s32.totalorder %s24, %s27
    %p33 = scmp.eq.s32.totalorder %s14, 0
    %p34 = por %p32, %p33
    %p35 = scmp.ne.s32.totalorder %s24, %s27
    %p36 = scmp.eq.s32.totalorder %s19, 1
    %p37 = por %p35, %p36
    %p38 = scmp.ne.s32.totalorder %s27, %s28
    %p39 = scmp.eq.s32.totalorder %s19, 0
    %p40 = por %p38, %p39
    %p41 = scmp.ne.s32.totalorder %s27, %s28
    %p42 = scmp.eq.s32.totalorder %s20, 1
    %p43 = por %p41, %p42
    %p45 = scmp.ne.s32.totalorder %s28, %s44
    %p46 = scmp.eq.s32.totalorder %s20, 0
    %p47 = por %p45, %p46
    %s48 = ssub.s32 %s14, %s21
    %p49 = scmp.eq.s32.totalorder %s48, 0
    %s51 = sadd.s32 %s50, 1
    %s52 = scalar_select %p49, %s50, %s51
    %p55 = pneg %p49
    %p56 = scmp.eq.s32.totalorder %s14, 1
    %p57 = por %p55, %p56
    %p58 = scmp.ne.s32.totalorder %s50, %s53
    %p59 = scmp.eq.s32.totalorder %s14, 0
    %p60 = por %p58, %p59
    %p61 = scmp.ne.s32.totalorder %s50, %s53
    %p62 = scmp.eq.s32.totalorder %s19, 1
    %p63 = por %p61, %p62
    %p64 = scmp.ne.s32.totalorder %s53, %s54
    %p65 = scmp.eq.s32.totalorder %s19, 0
    %p66 = por %p64, %p65
    %p67 = scmp.ne.s32.totalorder %s53, %s54
    %p68 = scmp.eq.s32.totalorder %s20, 1
    %p69 = por %p67, %p68
    %p71 = scmp.ne.s32.totalorder %s54, %s70
    %p72 = scmp.eq.s32.totalorder %s20, 0
    %p73 = por %p71, %p72
    %p74 = scmp.le.s32.totalorder 1, %s14
    %p75 = scmp.lt.s32.totalorder %s14, 3
    %p76 = pnand %p74, %p75
    %p77 = pneg %p76
    // Predicated region
    $region9: #{tpu_custom_call.1} parent=5 // pred_check
      _
    $region10: #{tpu_custom_call.1} parent=5 // pred_check_branch
      %79 = sbr.rel (%p76) target = $region12
    $region11: #{tpu_custom_call.1} parent=5 // pred_region
      %s80 = ssub.s32 %s14, 1
    $region12: #{tpu_custom_call.1} parent=5 // pred_fallthru
      _
    %p81 = scmp.lt.s32.totalorder %s14, 2
    // Predicated region
    $region13: #{tpu_custom_call.1} parent=5 // pred_check
      %p82 = pneg %p81
    $region14: #{tpu_custom_call.1} parent=5 // pred_check_branch
      %84 = sbr.rel (%p82) target = $region16
    $region15: #{tpu_custom_call.1} parent=5 // pred_region
      // Predicated region
      $region17: #{tpu_custom_call.1} parent=15 // pred_check
        %p85 = pneg %p34
      $region18: #{tpu_custom_call.1} parent=15 // pred_check_branch
        %87 = sbr.rel (%p85) target = $region20
      $region19: #{tpu_custom_call.1} parent=15 // pred_region
        %p88 = scmp.lt.s32.totalorder %s14, 1
        %s89 = scalar_select %p88, %s14, 1
        %s90 = smul.addr %s89, 8
        %s91 = scalar_lea.vmem %s1, %s90
      $region20: #{tpu_custom_call.1} parent=15 // pred_fallthru
        _
    $region16: #{tpu_custom_call.1} parent=5 // pred_fallthru
      _
    %p92 = scmp.le.s32.totalorder 1, %s14
    %p93 = scmp.lt.s32.totalorder %s14, 3
    %p94 = pnand %p92, %p93
    %p95 = pneg %p94
    // Predicated region
    $region21: #{tpu_custom_call.1} parent=5 // pred_check
      _
    $region22: #{tpu_custom_call.1} parent=5 // pred_check_branch
      %97 = sbr.rel (%p94) target = $region24
    $region23: #{tpu_custom_call.1} parent=5 // pred_region
      %s98 = ssub.s32 %s14, 1
      %p99 = scmp.lt.s32.totalorder %s19, 1
      %s100 = scalar_select %p99, %s19, 1
      %s101 = smul.addr %s100, 8
      %s102 = scalar_lea.vmem %s1, %s101
      %p103 = pneg %p40
      %p104 = pneg %p37
      %p105 = pneg %p66
      %p106 = pneg %p63
      %p107 = scmp.lt.s32.totalorder %s19, 1
      %s108 = scalar_select %p107, %s19, 1
      %s109 = smul.addr %s108, 8
      %s110 = scalar_lea.vmem %s2, %s109
      %p111 = scmp.lt.s32.totalorder %s19, 1
      %s112 = scalar_select %p111, %s19, 1
      %s113 = smul.addr %s112, 8
      %s114 = scalar_lea.vmem %s1, %s113
      %p115 = scmp.lt.s32.totalorder %s19, 1
      %s116 = scalar_select %p115, %s19, 1
      %s117 = smul.addr %s116, 8
      %s118 = scalar_lea.vmem %s2, %s117
      %v119 = vld [vmem:[%s114] sm:$0xff]
      %v120 = vunpack.c.0.s8 %v119
      %v121 = vunpack.c.1.s8 %v119
      %v122 = vunpack.c.2.s8 %v119
      %v123 = vunpack.c.3.s8 %v119
      %v124 = vand.u32 %v120, 255
      %v125 = vand.u32 %v121, 255
      %v126 = vand.u32 %v122, 255
      %v127 = vand.u32 %v123, 255
      %v128 = vcvt.s32.f32 %v124
      %v129 = vcvt.s32.f32 %v125
      %v130 = vcvt.s32.f32 %v126
      %v131 = vcvt.s32.f32 %v127
      %s132 = sld [smem:[#allocation3]]
      %p133 = scmp.gt.s32.totalorder %s132, 0
      %s134 = scalar_select %p133, 1.5, 1.0
      %s135 = sld [smem:[#allocation3 + $0x1]]
      %p136 = scmp.gt.s32.totalorder %s135, 0
      %s137 = scalar_select %p136, 1.3, 1.0
      %v138 = vstv %s134
      %v139 = vmul.f32 %v128, %v138
      %v140 = vmul.f32 %v129, %v138
      %v141 = vmul.f32 %v130, %v138
      %v142 = vmul.f32 %v131, %v138
      %v143 = vmax.f32 %v139, 0.0
      %v144 = vmax.f32 %v140, 0.0
      %v145 = vmax.f32 %v141, 0.0
      %v146 = vmax.f32 %v142, 0.0
      %v147 = vmin.f32 %v143, 255.0
      %v148 = vmin.f32 %v144, 255.0
      %v149 = vmin.f32 %v145, 255.0
      %v150 = vmin.f32 %v146, 255.0
      %v155 = vlaneseq
      %v156 = vshrl.u32 %v155, 7
      %v157 = vsub.s32 0, %v156
      %v158 = vrot.slane %v147, %v157
      %v159 = vlaneseq
      %v160 = vshrl.u32 %v159, 7
      %v161 = vsub.s32 4, %v160
      %v162 = vrot.slane %v147, %v161
      %v163 = vlaneseq
      %v164 = vshrl.u32 %v163, 7
      %v165 = vsub.s32 0, %v164
      %v166 = vrot.slane %v148, %v165
      %v167 = vlaneseq
      %v168 = vshrl.u32 %v167, 7
      %v169 = vsub.s32 4, %v168
      %v170 = vrot.slane %v148, %v169
      %v171 = vlaneseq
      %v172 = vshrl.u32 %v171, 7
      %v173 = vsub.s32 0, %v172
      %v174 = vrot.slane %v149, %v173
      %v175 = vlaneseq
      %v176 = vshrl.u32 %v175, 7
      %v177 = vsub.s32 4, %v176
      %v178 = vrot.slane %v149, %v177
      %v179 = vlaneseq
      %v180 = vshrl.u32 %v179, 7
      %v181 = vsub.s32 0, %v180
      %v182 = vrot.slane %v150, %v181
      %v183 = vlaneseq
      %v184 = vshrl.u32 %v183, 7
      %v185 = vsub.s32 4, %v184
      %v186 = vrot.slane %v150, %v185
      %vm195 = vcmask 1040384
      %v196 = vsel %vm195, %v158, 0.0
      %v197 = vsel %vm195, %v162, 0.0
      %v198 = vadd.f32 %v196, %v197
      %v199 = vsel %vm195, %v166, 0.0
      %v200 = vadd.f32 %v198, %v199
      %v201 = vsel %vm195, %v170, 0.0
      %v202 = vadd.f32 %v200, %v201
      %v203 = vsel %vm195, %v174, 0.0
      %v204 = vadd.f32 %v202, %v203
      %v205 = vsel %vm195, %v178, 0.0
      %v206 = vadd.f32 %v204, %v205
      %v207 = vsel %vm195, %v182, 0.0
      %v208 = vadd.f32 %v206, %v207
      %v209 = vsel %vm195, %v186, 0.0
      %v210 = vadd.f32 %v208, %v209
      %211 = vadd.xlane.f32.xlu0 %v210
      %v212 = vpop.xlane.xlu0 %211
      %v213 = vrcp.pop 1024.0
      %v214 = vmul.f32 %v212, %v213
      %v217 = vunpack.c.l.s4 839922192
      %v218 = vunpack.c.0.s8 %v217
      %v219 = vlaneseq
      %v220 = vshrl.u32 %v219, 7
      %v221 = vsub.s32 %v218, %v220
      %v222 = vrot.slane %v214, %v221
      %v224 = vsub.f32 %v147, %v222
      %v225 = vsub.f32 %v148, %v222
      %v226 = vsub.f32 %v149, %v222
      %v227 = vsub.f32 %v150, %v222
      %v228 = vstv %s137
      %v229 = vmul.f32 %v224, %v228
      %v230 = vmul.f32 %v225, %v228
      %v231 = vmul.f32 %v226, %v228
      %v232 = vmul.f32 %v227, %v228
      %v237 = vlaneseq
      %v238 = vshrl.u32 %v237, 7
      %v239 = vsub.s32 0, %v238
      %v240 = vrot.slane %v229, %v239
      %v241 = vlaneseq
      %v242 = vshrl.u32 %v241, 7
      %v243 = vsub.s32 4, %v242
      %v244 = vrot.slane %v229, %v243
      %v245 = vlaneseq
      %v246 = vshrl.u32 %v245, 7
      %v247 = vsub.s32 0, %v246
      %v248 = vrot.slane %v230, %v247
      %v249 = vlaneseq
      %v250 = vshrl.u32 %v249, 7
      %v251 = vsub.s32 4, %v250
      %v252 = vrot.slane %v230, %v251
      %v253 = vlaneseq
      %v254 = vshrl.u32 %v253, 7
      %v255 = vsub.s32 0, %v254
      %v256 = vrot.slane %v231, %v255
      %v257 = vlaneseq
      %v258 = vshrl.u32 %v257, 7
      %v259 = vsub.s32 4, %v258
      %v260 = vrot.slane %v231, %v259
      %v261 = vlaneseq
      %v262 = vshrl.u32 %v261, 7
      %v263 = vsub.s32 0, %v262
      %v264 = vrot.slane %v232, %v263
      %v265 = vlaneseq
      %v266 = vshrl.u32 %v265, 7
      %v267 = vsub.s32 4, %v266
      %v268 = vrot.slane %v232, %v267
      %v277 = vadd.f32 %v214, %v240
      %v278 = vadd.f32 %v214, %v244
      %v279 = vadd.f32 %v214, %v248
      %v280 = vadd.f32 %v214, %v252
      %v281 = vadd.f32 %v214, %v256
      %v282 = vadd.f32 %v214, %v260
      %v283 = vadd.f32 %v214, %v264
      %v284 = vadd.f32 %v214, %v268
      %v285 = vmax.f32 %v277, 0.0
      %v286 = vmax.f32 %v278, 0.0
      %v287 = vmax.f32 %v279, 0.0
      %v288 = vmax.f32 %v280, 0.0
      %v289 = vmax.f32 %v281, 0.0
      %v290 = vmax.f32 %v282, 0.0
      %v291 = vmax.f32 %v283, 0.0
      %v292 = vmax.f32 %v284, 0.0
      %v293 = vmin.f32 %v285, 255.0
      %v294 = vmin.f32 %v286, 255.0
      %v295 = vmin.f32 %v287, 255.0
      %v296 = vmin.f32 %v288, 255.0
      %v297 = vmin.f32 %v289, 255.0
      %v298 = vmin.f32 %v290, 255.0
      %v299 = vmin.f32 %v291, 255.0
      %v300 = vmin.f32 %v292, 255.0
      %v301 = vadd.f32 %v293, 0.5
      %v302 = vadd.f32 %v294, 0.5
      %v303 = vadd.f32 %v295, 0.5
      %v304 = vadd.f32 %v296, 0.5
      %v305 = vadd.f32 %v297, 0.5
      %v306 = vadd.f32 %v298, 0.5
      %v307 = vadd.f32 %v299, 0.5
      %v308 = vadd.f32 %v300, 0.5
      %v309 = vcvt.f32.s32.to.zero.pseudo %v301
      %v310 = vcvt.f32.s32.to.zero.pseudo %v302
      %v311 = vcvt.f32.s32.to.zero.pseudo %v303
      %v312 = vcvt.f32.s32.to.zero.pseudo %v304
      %v313 = vcvt.f32.s32.to.zero.pseudo %v305
      %v314 = vcvt.f32.s32.to.zero.pseudo %v306
      %v315 = vcvt.f32.s32.to.zero.pseudo %v307
      %v316 = vcvt.f32.s32.to.zero.pseudo %v308
      %v317 = vpack.c.b16 %v309, %v309
      %v318 = vpack.c.b8 %v317, %v317
      %v319 = vpack.c.b16 %v310, %v310
      %v320 = vpack.c.b8 %v319, %v319
      %v321 = vpack.c.b16 %v311, %v311
      %v322 = vpack.c.b8 %v321, %v321
      %v323 = vpack.c.b16 %v312, %v312
      %v324 = vpack.c.b8 %v323, %v323
      %v325 = vpack.c.b16 %v313, %v313
      %v326 = vpack.c.b8 %v325, %v325
      %v327 = vpack.c.b16 %v314, %v314
      %v328 = vpack.c.b8 %v327, %v327
      %v329 = vpack.c.b16 %v315, %v315
      %v330 = vpack.c.b8 %v329, %v329
      %v331 = vpack.c.b16 %v316, %v316
      %v332 = vpack.c.b8 %v331, %v331
      %v333 = vcombine.low %v318, %v320
      %v334 = vcombine.low %v322, %v324
      %v335 = vcombine.low %v326, %v328
      %v336 = vcombine.low %v330, %v332
      %v338 = vunpack.c.l.s4 1966171168
      %v339 = vunpack.c.0.s8 %v338
      %v340 = vlaneseq
      %v341 = vshrl.u32 %v340, 7
      %v342 = vsub.s32 %v339, %v341
      %v343 = vrot.slane %v333, %v342
      %v345 = vunpack.c.l.s4 1966171168
      %v346 = vunpack.c.0.s8 %v345
      %v347 = vlaneseq
      %v348 = vshrl.u32 %v347, 7
      %v349 = vsub.s32 %v346, %v348
      %v350 = vrot.slane %v334, %v349
      %v352 = vunpack.c.l.s4 1966171168
      %v353 = vunpack.c.0.s8 %v352
      %v354 = vlaneseq
      %v355 = vshrl.u32 %v354, 7
      %v356 = vsub.s32 %v353, %v355
      %v357 = vrot.slane %v335, %v356
      %v359 = vunpack.c.l.s4 1966171168
      %v360 = vunpack.c.0.s8 %v359
      %v361 = vlaneseq
      %v362 = vshrl.u32 %v361, 7
      %v363 = vsub.s32 %v360, %v362
      %v364 = vrot.slane %v336, %v363
      %v365 = vcombine.low %v343, %v350
      %v366 = vcombine.low %v357, %v364
      %v368 = vunpack.c.l.s4 1966171168
      %v369 = vunpack.c.0.s8 %v368
      %v370 = vlaneseq
      %v371 = vshrl.u32 %v370, 7
      %v372 = vsub.s32 %v369, %v371
      %v373 = vrot.slane %v365, %v372
      %v375 = vunpack.c.l.s4 1966171168
      %v376 = vunpack.c.0.s8 %v375
      %v377 = vlaneseq
      %v378 = vshrl.u32 %v377, 7
      %v379 = vsub.s32 %v376, %v378
      %v380 = vrot.slane %v366, %v379
      %v381 = vcombine.low %v373, %v380
      %vm382 = vcmask 1040384
      %vm383 = vsmask.f32 0
      %vm384 = vmand %vm382, %vm383
      %vm385 = vcmask 1041409
      %vm386 = vsmask.f32 1024
      %vm387 = vmand %vm385, %vm386
      %vm388 = vmor %vm387, %vm384
      %vm389 = vcmask 1042434
      %vm390 = vsmask.f32 2048
      %vm391 = vmand %vm389, %vm390
      %vm392 = vmor %vm391, %vm388
      %vm393 = vcmask 1043459
      %vm394 = vsmask.f32 3072
      %vm395 = vmand %vm393, %vm394
      %vm396 = vmor %vm395, %vm392
      %vm397 = vcmask 1044484
      %vm398 = vsmask.f32 4096
      %vm399 = vmand %vm397, %vm398
      %vm400 = vmor %vm399, %vm396
      %vm401 = vcmask 1045509
      %vm402 = vsmask.f32 5120
      %vm403 = vmand %vm401, %vm402
      %vm404 = vmor %vm403, %vm400
      %vm405 = vcmask 1046534
      %vm406 = vsmask.f32 6144
      %vm407 = vmand %vm405, %vm406
      %vm408 = vmor %vm407, %vm404
      %vm409 = vcmask 1047559
      %vm410 = vsmask.f32 7168
      %vm411 = vmand %vm409, %vm410
      %vm412 = vmor %vm411, %vm408
      %v413 = vld [vmem:[%s118] sm:$0xff]
      %v414 = vsel %vm412, %v381, %v413
      %415 = vst [vmem:[%s118] sm:$0xff] %v414
      %p416 = scmp.lt.s32.totalorder %s19, 1
      %s417 = scalar_select %p416, %s19, 1
      %s418 = smul.addr %s417, 8
      %s419 = scalar_lea.vmem %s2, %s418
      // Predicated region
      $region25: #{tpu_custom_call.1} parent=23 // pred_check
        %p420 = pneg %p63
      $region26: #{tpu_custom_call.1} parent=23 // pred_check_branch
        %422 = sbr.rel (%p420) target = $region28
      $region27: #{tpu_custom_call.1} parent=23 // pred_region
        _
      $region28: #{tpu_custom_call.1} parent=23 // pred_fallthru
        _
    $region24: #{tpu_custom_call.1} parent=5 // pred_fallthru
      _
    %p423 = scmp.le.s32.totalorder 2, %s14
    // Predicated region
    $region29: #{tpu_custom_call.1} parent=5 // pred_check
      %p424 = pneg %p423
    $region30: #{tpu_custom_call.1} parent=5 // pred_check_branch
      %426 = sbr.rel (%p424) target = $region32
    $region31: #{tpu_custom_call.1} parent=5 // pred_region
      %s427 = ssub.s32 %s14, 2
      // Predicated region
      $region33: #{tpu_custom_call.1} parent=31 // pred_check
        %p428 = pneg %p69
      $region34: #{tpu_custom_call.1} parent=31 // pred_check_branch
        %430 = sbr.rel (%p428) target = $region36
      $region35: #{tpu_custom_call.1} parent=31 // pred_region
        %p431 = scmp.lt.s32.totalorder %s20, 1
        %s432 = scalar_select %p431, %s20, 1
        %s433 = smul.addr %s432, 8
        %s434 = scalar_lea.vmem %s2, %s433
      $region36: #{tpu_custom_call.1} parent=31 // pred_fallthru
        _
    $region32: #{tpu_custom_call.1} parent=5 // pred_fallthru
      _
  $region6: #{tpu_custom_call.1} parent=0 // loop_footer
    %s18 = sadd.s32 1, %s14
  $region7: #{tpu_custom_call.1} parent=0 // loop_footer_branch
    %13 = sbr.rel target = $region3
  $region8: #{tpu_custom_call.1} parent=0 // loop_exit
    _

</llo_original>
